<compile_context>
chip_gen: v5e
topology: v5e:2x2
jax: 0.10.0
libtpu: 0.0.40
codegen_flags: <defaults>
</compile_context>

<pallas_src>
from typing import Sequence

import jax
import jax.numpy as jnp
from jax.experimental import pallas as pl
from jax.experimental.pallas import tpu as pltpu


# ----------------------------------------------------------------------------
# Tiled Pallas matmul kernel(s): y = x @ W + b (+ residual)
# ----------------------------------------------------------------------------
def _make_linear_kernel(has_residual: bool):
    """Build the kernel body; residual ref is only present when needed."""

    def kernel(x_ref, w_ref, b_ref, *rest):
        if has_residual:
            r_ref, o_ref, acc_ref = rest
        else:
            (o_ref, acc_ref) = rest
            r_ref = None

        k = pl.program_id(2)

        @pl.when(k == 0)
        def _():
            acc_ref[...] = jnp.zeros_like(acc_ref)

        # MXU matmul with f32 accumulation (operands may be bf16 or f32).
        acc_ref[...] += jnp.dot(
            x_ref[...], w_ref[...], preferred_element_type=jnp.float32
        )

        @pl.when(k == pl.num_programs(2) - 1)
        def _():
            # Epilogue stays in f32 (bias + optional residual), then casts once.
            y = acc_ref[...] + b_ref[...].astype(jnp.float32)
            if r_ref is not None:
                y = y + r_ref[...].astype(jnp.float32)
            o_ref[...] = y.astype(o_ref.dtype)

    return kernel


def _round_up(a: int, b: int) -> int:
    return ((a + b - 1) // b) * b


def linear_pallas(x, w, b, residual=None, *, tm=256, tn=512, tk=512,
                  mxu_dtype=None):
    """x: [M, K], w: [K, N], b: [N], residual: [M, N] or None -> [M, N].

    Pads M/N/K up to hardware-friendly tiles (lane-dense output, exact grid),
    runs a 3-D tiled matmul with an f32 VMEM accumulator, and slices the
    padding back off.  `mxu_dtype=jnp.bfloat16` feeds the MXU bf16 operands
    (accumulation stays f32) for v6e/v7x when numerics allow.
    """
    M, K = x.shape
    K2, N = w.shape
    assert K == K2, (K, K2)
    out_dtype = x.dtype

    # Effective tile sizes: capped by the (padded-to-minimum) dims so small
    # shapes don't blow up, but always multiples of (8, 128).
    tm_eff = min(tm, _round_up(M, 8))
    tn_eff = min(tn, _round_up(N, 128))
    tk_eff = min(tk, _round_up(K, 128))

    M_pad = _round_up(M, tm_eff)
    N_pad = _round_up(N, tn_eff)
    K_pad = _round_up(K, tk_eff)

    x_p = jnp.pad(x, ((0, M_pad - M), (0, K_pad - K)))
    w_p = jnp.pad(w, ((0, K_pad - K), (0, N_pad - N)))
    b_p = jnp.pad(b, (0, N_pad - N)).reshape(1, N_pad)

    if mxu_dtype is not None:
        x_p = x_p.astype(mxu_dtype)
        w_p = w_p.astype(mxu_dtype)

    has_residual = residual is not None
    operands = [x_p, w_p, b_p]
    in_specs = [
        pl.BlockSpec((tm_eff, tk_eff), lambda i, j, k: (i, k)),  # x tile
        pl.BlockSpec((tk_eff, tn_eff), lambda i, j, k: (k, j)),  # W tile
        pl.BlockSpec((1, tn_eff), lambda i, j, k: (0, j)),       # bias row
    ]
    bytes_accessed = (
        x_p.size * x_p.dtype.itemsize
        + w_p.size * w_p.dtype.itemsize
        + b_p.size * b_p.dtype.itemsize
        + M_pad * N_pad * jnp.dtype(out_dtype).itemsize
    )
    if has_residual:
        r_p = jnp.pad(residual, ((0, M_pad - M), (0, N_pad - N)))
        operands.append(r_p)
        in_specs.append(pl.BlockSpec((tm_eff, tn_eff), lambda i, j, k: (i, j)))
        bytes_accessed += r_p.size * r_p.dtype.itemsize

    grid = (M_pad // tm_eff, N_pad // tn_eff, K_pad // tk_eff)

    out = pl.pallas_call(
        _make_linear_kernel(has_residual),
        out_shape=jax.ShapeDtypeStruct((M_pad, N_pad), out_dtype),
        grid_spec=pltpu.PrefetchScalarGridSpec(
            num_scalar_prefetch=0,
            grid=grid,
            in_specs=in_specs,
            out_specs=pl.BlockSpec((tm_eff, tn_eff), lambda i, j, k: (i, j)),
            scratch_shapes=[pltpu.VMEM((tm_eff, tn_eff), jnp.float32)],
        ),
        compiler_params=pltpu.CompilerParams(
            # M/N axes parallel (megacore-shardable on v7x), K is the reduction.
            dimension_semantics=("parallel", "parallel", "arbitrary"),
            # Explicit VMEM budget with headroom; safe on v5e/v6e/v7x.
            vmem_limit_bytes=32 * 1024 * 1024,
        ),
        cost_estimate=pl.CostEstimate(
            flops=2 * M_pad * N_pad * K_pad,
            transcendentals=0,
            bytes_accessed=int(bytes_accessed),
        ),
    )(*operands)

    return out[:M, :N]


# ----------------------------------------------------------------------------
# Wrapped "inner module": Linear that accepts selective kwargs and returns a
# tuple (output, aux) so that `use_first_output` matters.
# ----------------------------------------------------------------------------
class LinearWithKwargs:
    def __init__(self, w, b, mxu_dtype=None):
        self.w = w
        self.b = b
        self.mxu_dtype = mxu_dtype  # set to jnp.bfloat16 on v6e/v7x if desired

    def __call__(self, x, *, residual=None, attention_mask=None):
        # `attention_mask` is deliberately ignored by this toy module; it is
        # anyway stripped by ActiveKwargs when not in active_keys.
        y = linear_pallas(x, self.w, self.b, residual, mxu_dtype=self.mxu_dtype)
        aux = jnp.sum(y)  # dummy second output; DCE'd under jit when unused
        return (y, aux)


# ----------------------------------------------------------------------------
# ActiveKwargs: exact forward semantics of the PyTorch module.
# ----------------------------------------------------------------------------
class ActiveKwargs:
    """
    A module with selective kwargs. Filters kwargs down to `active_keys`,
    calls the wrapped module, and optionally returns only the first output.
    """

    def __init__(self, module, active_keys: Sequence[str],
                 use_first_output: bool = False):
        self.module = module
        self.active_keys = set(active_keys)
        self.use_first_output = use_first_output

    def __call__(self, input, *args, **kwargs):
        kwargs = {k: v for k, v in kwargs.items() if k in self.active_keys}
        output = self.module(input, *args, **kwargs)
        if self.use_first_output and (not isinstance(output, jnp.ndarray)):
            output = output[0]
        return output


# ----------------------------------------------------------------------------
# Demo
# ----------------------------------------------------------------------------
if __name__ == "__main__":
    SEQ, HIDDEN = 8, 32

    key = jax.random.PRNGKey(0)
    kx, kr, kw, kb = jax.random.split(key, 4)

    x = jax.random.normal(kx, (SEQ, HIDDEN), dtype=jnp.float32)
    residual = jax.random.normal(kr, (SEQ, HIDDEN), dtype=jnp.float32)
    # Deterministic parameter init (synthetic; no checkpoint load).
    w = jax.random.normal(kw, (HIDDEN, HIDDEN), dtype=jnp.float32) * 0.05
    b = jax.random.normal(kb, (HIDDEN,), dtype=jnp.float32) * 0.1
    mask = jnp.ones((SEQ, SEQ), dtype=jnp.float32)

    inner = LinearWithKwargs(w, b)
    # "residual" active  -> residual kwarg reaches the module (5-operand kernel)
    layer_with_res = ActiveKwargs(inner, active_keys=("residual",),
                                  use_first_output=True)
    # nothing active     -> residual filtered out (4-operand kernel, no zero
    #                       tensor ever materialized)
    layer_no_res = ActiveKwargs(inner, active_keys=(), use_first_output=True)

    @jax.jit
    def forward_with(x, residual, mask):
        # inactive kwarg "attention_mask" must be filtered out before the call
        return layer_with_res(x, residual=residual, attention_mask=mask)

    @jax.jit
    def forward_without(x, residual, mask):
        # both kwargs filtered out -> plain y = x @ W + b
        return layer_no_res(x, residual=residual, attention_mask=mask)

    out_with = jax.block_until_ready(forward_with(x, residual, mask))
    out_without = jax.block_until_ready(forward_without(x, residual, mask))

    # Reference checks in plain JAX.
    ref_with = x @ w + b[None, :] + residual
    ref_without = x @ w + b[None, :]
    assert out_with.shape == (SEQ, HIDDEN), out_with.shape
    assert out_without.shape == (SEQ, HIDDEN), out_without.shape
    assert jnp.allclose(out_with, ref_with, atol=1e-4, rtol=1e-4), \
        "mismatch vs reference (with residual)"
    assert jnp.allclose(out_without, ref_without, atol=1e-4, rtol=1e-4), \
        "mismatch vs reference (no residual)"

    print("KERNEL_OK")
</pallas_src>

<mosaic_0001>
module attributes {stable_mosaic.version = 11 : i64} {
  func.func @kernel(%arg0: i32, %arg1: i32, %arg2: i32, %arg3: memref<8x128xf32, #tpu.memory_space<vmem>>, %arg4: memref<128x128xf32, #tpu.memory_space<vmem>>, %arg5: memref<1x128xf32, #tpu.memory_space<vmem>>, %arg6: memref<8x128xf32, #tpu.memory_space<vmem>>, %arg7: memref<8x128xf32, #tpu.memory_space<vmem>>, %arg8: memref<8x128xf32, #tpu.memory_space<vmem>>) attributes {dimension_semantics = [#tpu.dimension_semantics<parallel>, #tpu.dimension_semantics<parallel>, #tpu.dimension_semantics<arbitrary>], iteration_bounds = array<i64: 1, 1, 1>, scalar_prefetch = 0 : i64, scratch_operands = 1 : i64, tpu.core_type = #tpu.core_type<tc>, window_params = [{transform_indices = @transform_0, window_bounds = array<i64: 8, 128>}, {transform_indices = @transform_1, window_bounds = array<i64: 128, 128>}, {transform_indices = @transform_2, window_bounds = array<i64: 1, 128>}, {transform_indices = @transform_3, window_bounds = array<i64: 8, 128>}, {transform_indices = @transform_4, window_bounds = array<i64: 8, 128>}]} {
    %c0_i32 = arith.constant 0 : i32
    %0 = arith.cmpi eq, %arg2, %c0_i32 : i32
    %1 = arith.extui %0 : i1 to i32
    %c0_i32_0 = arith.constant 0 : i32
    %2 = arith.cmpi ne, %1, %c0_i32_0 : i32
    scf.if %2 {
      %cst_10 = arith.constant 0.000000e+00 : f32
      %12 = vector.broadcast %cst_10 : f32 to vector<8x128xf32>
      %c0_11 = arith.constant 0 : index
      %c0_12 = arith.constant 0 : index
      %13 = vector.load %arg8[%c0_11, %c0_12] : memref<8x128xf32, #tpu.memory_space<vmem>>, vector<8x128xf32>
      tpu.vector_store %arg8[%c0_11, %c0_12], %12 {strides = array<i32>} : memref<8x128xf32, #tpu.memory_space<vmem>>, vector<8x128xf32>,
    } else {
    }
    %c0 = arith.constant 0 : index
    %c0_1 = arith.constant 0 : index
    %3 = vector.load %arg8[%c0, %c0_1] : memref<8x128xf32, #tpu.memory_space<vmem>>, vector<8x128xf32>
    %c0_2 = arith.constant 0 : index
    %c0_3 = arith.constant 0 : index
    %4 = vector.load %arg3[%c0_2, %c0_3] : memref<8x128xf32, #tpu.memory_space<vmem>>, vector<8x128xf32>
    %c0_4 = arith.constant 0 : index
    %c0_5 = arith.constant 0 : index
    %5 = vector.load %arg4[%c0_4, %c0_5] : memref<128x128xf32, #tpu.memory_space<vmem>>, vector<128x128xf32>
    %cst = arith.constant dense<0.000000e+00> : vector<8x128xf32>
    %6 = tpu.matmul %4, %5, %cst {dimension_numbers = #tpu.dot_dimension_numbers<[1], [0], [0], [1], [0, 0, 1, 1], [], []>} : vector<8x128xf32>, vector<128x128xf32>, vector<8x128xf32> -> vector<8x128xf32>
    %7 = arith.addf %3, %6 : vector<8x128xf32>
    %c0_6 = arith.constant 0 : index
    %c0_7 = arith.constant 0 : index
    %8 = vector.load %arg8[%c0_6, %c0_7] : memref<8x128xf32, #tpu.memory_space<vmem>>, vector<8x128xf32>
    tpu.vector_store %arg8[%c0_6, %c0_7], %7 {strides = array<i32>} : memref<8x128xf32, #tpu.memory_space<vmem>>, vector<8x128xf32>,
    %c0_i32_8 = arith.constant 0 : i32
    %9 = arith.cmpi eq, %arg2, %c0_i32_8 : i32
    %10 = arith.extui %9 : i1 to i32
    %c0_i32_9 = arith.constant 0 : i32
    %11 = arith.cmpi ne, %10, %c0_i32_9 : i32
    scf.if %11 {
      %c0_10 = arith.constant 0 : index
      %c0_11 = arith.constant 0 : index
      %12 = vector.load %arg8[%c0_10, %c0_11] : memref<8x128xf32, #tpu.memory_space<vmem>>, vector<8x128xf32>
      %c0_12 = arith.constant 0 : index
      %c0_13 = arith.constant 0 : index
      %13 = vector.load %arg5[%c0_12, %c0_13] : memref<1x128xf32, #tpu.memory_space<vmem>>, vector<1x128xf32>
      %14 = vector.broadcast %13 : vector<1x128xf32> to vector<8x128xf32>
      %15 = arith.addf %12, %14 : vector<8x128xf32>
      %c0_14 = arith.constant 0 : index
      %c0_15 = arith.constant 0 : index
      %16 = vector.load %arg6[%c0_14, %c0_15] : memref<8x128xf32, #tpu.memory_space<vmem>>, vector<8x128xf32>
      %17 = arith.addf %15, %16 : vector<8x128xf32>
      %c0_16 = arith.constant 0 : index
      %c0_17 = arith.constant 0 : index
      %18 = vector.load %arg7[%c0_16, %c0_17] : memref<8x128xf32, #tpu.memory_space<vmem>>, vector<8x128xf32>
      tpu.vector_store %arg7[%c0_16, %c0_17], %17 {strides = array<i32>} : memref<8x128xf32, #tpu.memory_space<vmem>>, vector<8x128xf32>,
    } else {
    }
    return
  }
  func.func @transform_0(%arg0: i32, %arg1: i32, %arg2: i32) -> (i32, i32) {
    %c0_i32 = arith.constant 0 : i32
    return %arg0, %arg2 : i32, i32
  }
  func.func @transform_1(%arg0: i32, %arg1: i32, %arg2: i32) -> (i32, i32) {
    %c0_i32 = arith.constant 0 : i32
    return %arg2, %arg1 : i32, i32
  }
  func.func @transform_2(%arg0: i32, %arg1: i32, %arg2: i32) -> (i32, i32) {
    %c0_i32 = arith.constant 0 : i32
    %c0_i32_0 = arith.constant 0 : i32
    return %c0_i32, %arg1 : i32, i32
  }
  func.func @transform_3(%arg0: i32, %arg1: i32, %arg2: i32) -> (i32, i32) {
    %c0_i32 = arith.constant 0 : i32
    return %arg0, %arg1 : i32, i32
  }
  func.func @transform_4(%arg0: i32, %arg1: i32, %arg2: i32) -> (i32, i32) {
    %c0_i32 = arith.constant 0 : i32
    return %arg0, %arg1 : i32, i32
  }
}

</mosaic_0001>

<llo_original>
// kernel: forward_with.1
$region0: #{forward_with.1}
  #allocation0 [shape = 'u32[]', space=smem, size = 0x4, offset = 0x4, fixed_abs, tag = 'smem constant byte address 0x4 - core index']
  #allocation1 [shape = 'u32[72,128]{1,0:T(1,128)}', space=vmem, size = 0x9000, scoped, tag = 'internal scratch']
  #allocation2 [shape = 'f32[8,128]{1,0:T(8,128)}', space=vmem, size = 0x1000, scoped, tag = 'scratch operand']
  %s0 = inlined_call_operand.vmem [shape: f32[8,128], index: 0, kind: input, shape index: {}]
  %s1 = inlined_call_operand.hbm [shape: f32[128,128], index: 1, kind: input, shape index: {}]
  %s2 = inlined_call_operand.vmem [shape: f32[1,128], index: 2, kind: input, shape index: {}]
  %s3 = inlined_call_operand.vmem [shape: f32[8,128], index: 3, kind: input, shape index: {}]
  %s4 = inlined_call_operand.hbm [shape: f32[8,128], index: 4, kind: output, shape index: {}]
  %s5 = sld [smem:[#allocation0]]
  $region38: #{forward_with.1} parent=0
    _
  %s7 = ssub.s32 1, %s5
  %s8 = scalar_select 0, %s7, %s5
  $region1: #{forward_with.1} parent=0
    #allocation3 [shape = 'u8[65536]{0}', space=vmem, size = 0x10000, scoped, tag = 'input window, operand 1, single buffered']
    #allocation4 [shape = 's32[1]{0}', space=sflag, size = 0x4, scoped, tag = 'scoped memory for forward_with.1']
    #allocation5 [shape = 's32[1]{0}', space=sflag, size = 0x4, scoped, tag = 'scoped memory for forward_with.1']
    #allocation6 [shape = 'u8[4096]{0}', space=vmem, size = 0x1000, scoped, tag = 'output window, operand 0, single buffered']
    %9 = vsyncpa [#allocation4], 0
    %10 = vsyncpa [#allocation5], 0
    // Predicated region
    $region2: #{forward_with.1} parent=1 // pred_check
      _
    $region3: #{forward_with.1} parent=1 // pred_check_branch
      %12 = sbr.rel (0) target = $region5
    $region4: #{forward_with.1} parent=1 // pred_region
      _
    $region5: #{forward_with.1} parent=1 // pred_fallthru
      _
    // Predicated region
    $region6: #{forward_with.1} parent=1 // pred_check
      _
    $region7: #{forward_with.1} parent=1 // pred_check_branch
      %14 = sbr.rel (0) target = $region9
    $region8: #{forward_with.1} parent=1 // pred_region
      %16 = vsyncadd [#allocation4], 0
      %s17 = sshll.u32 %s1, 4
      %s18 = int_to_ptr.hbm [resolvable:$true] %s17
      %s19 = sshll.u32 [#allocation3], 4
      %s20 = int_to_ptr.vmem [resolvable:$true] %s19
      %25 = dma.hbm_to_vmem [thread:$0]  %s18, 2048, %s20, [#allocation4], 128, 128, 8
    $region9: #{forward_with.1} parent=1 // pred_fallthru
      _
    // Predicated region
    $region10: #{forward_with.1} parent=1 // pred_check
      _
    $region11: #{forward_with.1} parent=1 // pred_check_branch
      %27 = sbr.rel (0) target = $region13
    $region12: #{forward_with.1} parent=1 // pred_region
      _
    $region13: #{forward_with.1} parent=1 // pred_fallthru
      _
    // Predicated region
    $region14: #{forward_with.1} parent=1 // pred_check
      _
    $region15: #{forward_with.1} parent=1 // pred_check_branch
      %29 = sbr.rel (0) target = $region17
    $region16: #{forward_with.1} parent=1 // pred_region
      _
    $region17: #{forward_with.1} parent=1 // pred_fallthru
      _
    // Predicated region
    $region18: #{forward_with.1} parent=1 // pred_check
      _
    $region19: #{forward_with.1} parent=1 // pred_check_branch
      %31 = sbr.rel (0) target = $region21
    $region20: #{forward_with.1} parent=1 // pred_region
      %33 = dma.done [#allocation4], 2048
    $region21: #{forward_with.1} parent=1 // pred_fallthru
      _
    %p34 = scmp.eq.s32.totalorder 0, 0
    // Predicated region
    $region22: #{forward_with.1} parent=1 // pred_check
      %p35 = pneg %p34
    $region23: #{forward_with.1} parent=1 // pred_check_branch
      %37 = sbr.rel (%p35) target = $region25
    $region24: #{forward_with.1} parent=1 // pred_region
      %38 = vst [vmem:[#allocation2] sm:$0xff] 0.0
    $region25: #{forward_with.1} parent=1 // pred_fallthru
      _
    %v39 = vld [vmem:[#allocation2] sm:$0xff]
    %v40 = vld [vmem:[%s0] sm:$0xff]
    %v41 = vld [vmem:[#allocation3] sm:$0xff]
    %v42 = vld [vmem:[#allocation3 + $0x8] sm:$0xff]
    %v43 = vld [vmem:[#allocation3 + $0x10] sm:$0xff]
    %v44 = vld [vmem:[#allocation3 + $0x18] sm:$0xff]
    %v45 = vld [vmem:[#allocation3 + $0x20] sm:$0xff]
    %v46 = vld [vmem:[#allocation3 + $0x28] sm:$0xff]
    %v47 = vld [vmem:[#allocation3 + $0x30] sm:$0xff]
    %v48 = vld [vmem:[#allocation3 + $0x38] sm:$0xff]
    %v49 = vld [vmem:[#allocation3 + $0x40] sm:$0xff]
    %v50 = vld [vmem:[#allocation3 + $0x48] sm:$0xff]
    %v51 = vld [vmem:[#allocation3 + $0x50] sm:$0xff]
    %v52 = vld [vmem:[#allocation3 + $0x58] sm:$0xff]
    %v53 = vld [vmem:[#allocation3 + $0x60] sm:$0xff]
    %v54 = vld [vmem:[#allocation3 + $0x68] sm:$0xff]
    %v55 = vld [vmem:[#allocation3 + $0x70] sm:$0xff]
    %v56 = vld [vmem:[#allocation3 + $0x78] sm:$0xff]
    %57 = vmatpush.msra.mxu0 %v56
    %58 = vmatpush.msra.mxu0 %v55
    %59 = vmatpush.msra.mxu0 %v54
    %60 = vmatpush.msra.mxu0 %v53
    %61 = vmatpush.msra.mxu0 %v52
    %62 = vmatpush.msra.mxu0 %v51
    %63 = vmatpush.msra.mxu0 %v50
    %64 = vmatpush.msra.mxu0 %v49
    %65 = vmatpush.msra.mxu0 %v48
    %66 = vmatpush.msra.mxu0 %v47
    %67 = vmatpush.msra.mxu0 %v46
    %68 = vmatpush.msra.mxu0 %v45
    %69 = vmatpush.msra.mxu0 %v44
    %70 = vmatpush.msra.mxu0 %v43
    %71 = vmatpush.msra.mxu0 %v42
    %72 = vmatpush.msra.mxu0 %v41
    %73 = vmatmul.f32.gmra.mxu0 %v40
    %v74 = vpop.f32.mrf.mxu0
    %v75 = vadd.f32 0.0, %v74
    %76 = vdwg.mxu0
    %v77 = vadd.f32 %v39, %v75
    %78 = vst [vmem:[#allocation2] sm:$0xff] %v77
    // Predicated region
    $region26: #{forward_with.1} parent=1 // pred_check
      %p79 = pneg %p34
    $region27: #{forward_with.1} parent=1 // pred_check_branch
      %81 = sbr.rel (%p79) target = $region29
    $region28: #{forward_with.1} parent=1 // pred_region
      %v82 = vld [vmem:[#allocation2] sm:$0xff]
      %v83 = vld [vmem:[%s2] sm:$0x1]
      %v85 = vperm.slane %v83, 0
      %v87 = vadd.f32 %v82, %v85
      %v88 = vld [vmem:[%s3] sm:$0xff]
      %v89 = vadd.f32 %v87, %v88
      %90 = vst [vmem:[#allocation6] sm:$0xff] %v89
    $region29: #{forward_with.1} parent=1 // pred_fallthru
      _
    // Predicated region
    $region30: #{forward_with.1} parent=1 // pred_check
      _
    $region31: #{forward_with.1} parent=1 // pred_check_branch
      %92 = sbr.rel (0) target = $region33
    $region32: #{forward_with.1} parent=1 // pred_region
      %94 = vsyncadd [#allocation5], 0
      %s96 = sshll.u32 [#allocation6], 4
      %s97 = int_to_ptr.vmem [resolvable:$true] %s96
      %s98 = sshll.u32 %s4, 4
      %s99 = int_to_ptr.hbm [resolvable:$true] %s98
      %101 = dma.vmem_to_hbm [thread:$0]  %s97, 128, %s99, [#allocation5]
    $region33: #{forward_with.1} parent=1 // pred_fallthru
      _
    // Predicated region
    $region34: #{forward_with.1} parent=1 // pred_check
      _
    $region35: #{forward_with.1} parent=1 // pred_check_branch
      %103 = sbr.rel (0) target = $region37
    $region36: #{forward_with.1} parent=1 // pred_region
      %105 = dma.done [#allocation5], 128
    $region37: #{forward_with.1} parent=1 // pred_fallthru
      _
    %106 = vsyncpa [#allocation4], 1
    %107 = vsyncpa [#allocation5], 1

</llo_original>
